<compile_context>
chip_gen: v7x
topology: tpu7x:2x2x1
jax: 0.10.0
libtpu: 0.0.40
codegen_flags: <defaults>
</compile_context>

<pallas_src>
import functools

import jax
import jax.numpy as jnp
from jax import lax
from jax.experimental import pallas as pl
from jax.experimental.pallas import tpu as pltpu

EPSILON = 1e-08  # matches the module's default epsilon=1e-08 (not nn.InstanceNorm2d's 1e-5)


def _vmem_budget_bytes() -> int:
    """Generation-aware VMEM budget (bytes) with a conservative cross-chip fallback."""
    try:
        cap = int(pltpu.get_tpu_info().vmem_capacity_bytes)
        # Leave headroom for compiler scratch / internal buffers.
        return max(int(cap * 0.65), 32 * 1024 * 1024)
    except Exception:
        # Safe on v7x (64 MiB physical) as well as v5e/v6e (128 MiB).
        return 48 * 1024 * 1024


def _pick_tile_rows(nc: int, hw_pad: int, itemsize: int, vmem_budget_bytes: int) -> int:
    """Largest row-tile that fits the VMEM budget (mult. of 8), with >=2 grid steps if possible."""
    # Pallas double-buffers input AND output (4 tile copies) plus in-kernel f32
    # temporaries -> budget roughly 1/8 of the VMEM limit per tile.
    bytes_per_row = hw_pad * max(itemsize, 4)  # f32 temporaries dominate
    max_rows = max(int(vmem_budget_bytes) // (8 * bytes_per_row), 1)
    tile = min(max_rows, nc)
    if tile >= 8:
        tile = (tile // 8) * 8  # sublane alignment
    else:
        # (8,128) rule: a non-multiple-of-8 row count is only OK if it spans the full dim.
        tile = nc if nc < 8 else 8
    # Keep at least 2 grid steps when possible so v7x's 2 TensorCores both get work.
    if nc >= 16 and tile >= nc:
        tile = ((pl.cdiv(nc, 2) + 7) // 8) * 8
    # TODO(synk): for very large HW (single 8-row tile near the VMEM cap, e.g. >=512x512
    # on v7x) switch to a two-level reduction over a blocked HW axis.
    return max(tile, 1)


def _instance_norm_kernel(x_ref, o_ref, *, hw: int, padded: bool):
    # x_ref: (TILE_ROWS, HW_pad) block in VMEM. One row == one (n, c) instance.
    x = x_ref[...].astype(jnp.float32)
    inv_hw = 1.0 / float(hw)
    mean = jnp.sum(x, axis=-1, keepdims=True) * inv_hw      # mean over real spatial elems
    xc = x - mean                                            # x - mean (keepdim broadcast)
    if padded:
        # Padded lanes hold zeros in x, so xc there equals -mean; mask them out of the variance.
        lane = lax.broadcasted_iota(jnp.int32, x.shape, dimension=1)
        sq = jnp.where(lane < hw, xc * xc, 0.0)
    else:
        sq = xc * xc
    var = jnp.sum(sq, axis=-1, keepdims=True) * inv_hw       # biased variance (matches torch)
    inv = lax.rsqrt(var + EPSILON)                            # rsqrt(... + eps) on the EUP
    o_ref[...] = (xc * inv).astype(o_ref.dtype)


def instance_norm(x: jax.Array, tile_rows: int | None = None) -> jax.Array:
    """InstanceNorm forward. x: (N, C, H, W) -> (N, C, H, W)."""
    N, C, H, W = x.shape
    NC, HW = N * C, H * W

    # Lane-dense last dim: pad HW up to a multiple of 128.
    HW_pad = max(((HW + 127) // 128) * 128, 128)
    padded = HW_pad != HW

    x2 = x.reshape(NC, HW)
    if padded:
        x2 = jnp.pad(x2, ((0, 0), (0, HW_pad - HW)))

    vmem_budget = _vmem_budget_bytes()
    if tile_rows is None:
        tile_rows = _pick_tile_rows(NC, HW_pad, x.dtype.itemsize, vmem_budget)

    grid = (pl.cdiv(NC, tile_rows),)

    kernel = functools.partial(_instance_norm_kernel, hw=HW, padded=padded)

    cost = pl.CostEstimate(
        flops=4 * NC * HW,
        transcendentals=NC,
        bytes_accessed=2 * NC * HW * x.dtype.itemsize,
    )

    out2 = pl.pallas_call(
        kernel,
        out_shape=jax.ShapeDtypeStruct((NC, HW_pad), x.dtype),
        grid=grid,
        in_specs=[pl.BlockSpec((tile_rows, HW_pad), lambda i: (i, 0))],
        out_specs=pl.BlockSpec((tile_rows, HW_pad), lambda i: (i, 0)),
        compiler_params=pltpu.CompilerParams(
            dimension_semantics=("parallel",),
            vmem_limit_bytes=int(vmem_budget),
        ),
        cost_estimate=cost,
    )(x2)

    if padded:
        out2 = out2[:, :HW]
    return out2.reshape(N, C, H, W)


def _reference(x):
    # Pure-JAX reference matching the PyTorch module exactly.
    xc = x - jnp.mean(x, axis=(2, 3), keepdims=True)
    inv = lax.rsqrt(jnp.mean(xc * xc, axis=(2, 3), keepdims=True) + EPSILON)
    return xc * inv


if __name__ == "__main__":
    key = jax.random.PRNGKey(0)

    # Primary test: small NCHW shape, HW already 128-lane dense (16*16 = 256).
    x = jax.random.normal(key, (2, 4, 16, 16), dtype=jnp.float32)
    out = jax.block_until_ready(instance_norm(x))
    ref = _reference(x)
    assert out.shape == ref.shape and out.dtype == ref.dtype
    assert jnp.allclose(out, ref, atol=1e-5, rtol=1e-5), "mismatch vs reference (16x16)"

    # Secondary test: non-128-aligned spatial extent exercises the lane-padding path.
    x2 = jax.random.normal(jax.random.PRNGKey(1), (2, 4, 7, 7), dtype=jnp.float32)
    out2 = jax.block_until_ready(instance_norm(x2))
    ref2 = _reference(x2)
    assert jnp.allclose(out2, ref2, atol=1e-5, rtol=1e-5), "mismatch vs reference (7x7)"

    print("KERNEL_OK")
</pallas_src>

<mosaic_0001>
module attributes {stable_mosaic.version = 11 : i64} {
  func.func @_instance_norm_kernel(%arg0: i32, %arg1: memref<8x256xf32, #tpu.memory_space<vmem>>, %arg2: memref<8x256xf32, #tpu.memory_space<vmem>>) attributes {dimension_semantics = [#tpu.dimension_semantics<parallel>], iteration_bounds = array<i64: 1>, scalar_prefetch = 0 : i64, scratch_operands = 0 : i64, tpu.core_type = #tpu.core_type<tc>, window_params = [{transform_indices = @transform_0, window_bounds = array<i64: 8, 256>}, {transform_indices = @transform_1, window_bounds = array<i64: 8, 256>}]} {
    %c0 = arith.constant 0 : index
    %c0_0 = arith.constant 0 : index
    %0 = vector.load %arg1[%c0, %c0_0] : memref<8x256xf32, #tpu.memory_space<vmem>>, vector<8x256xf32>
    %cst = arith.constant dense<0.000000e+00> : vector<8xf32>
    %1 = vector.multi_reduction <add>, %0, %cst [1] : vector<8x256xf32> to vector<8xf32>
    %2 = vector.shape_cast %1 : vector<8xf32> to vector<8x1xf32>
    %cst_1 = arith.constant 3.906250e-03 : f32
    %3 = vector.broadcast %cst_1 : f32 to vector<8x1xf32>
    %4 = arith.mulf %2, %3 : vector<8x1xf32>
    %5 = vector.broadcast %4 : vector<8x1xf32> to vector<8x256xf32>
    %6 = arith.subf %0, %5 : vector<8x256xf32>
    %7 = arith.mulf %6, %6 : vector<8x256xf32>
    %cst_2 = arith.constant dense<0.000000e+00> : vector<8xf32>
    %8 = vector.multi_reduction <add>, %7, %cst_2 [1] : vector<8x256xf32> to vector<8xf32>
    %9 = vector.shape_cast %8 : vector<8xf32> to vector<8x1xf32>
    %cst_3 = arith.constant 3.906250e-03 : f32
    %10 = vector.broadcast %cst_3 : f32 to vector<8x1xf32>
    %11 = arith.mulf %9, %10 : vector<8x1xf32>
    %cst_4 = arith.constant 9.99999993E-9 : f32
    %12 = vector.broadcast %cst_4 : f32 to vector<8x1xf32>
    %13 = arith.addf %11, %12 : vector<8x1xf32>
    %14 = math.rsqrt %13 : vector<8x1xf32>
    %15 = vector.broadcast %14 : vector<8x1xf32> to vector<8x256xf32>
    %16 = arith.mulf %6, %15 : vector<8x256xf32>
    %c0_5 = arith.constant 0 : index
    %c0_6 = arith.constant 0 : index
    %17 = vector.load %arg2[%c0_5, %c0_6] : memref<8x256xf32, #tpu.memory_space<vmem>>, vector<8x256xf32>
    tpu.vector_store %arg2[%c0_5, %c0_6], %16 {strides = array<i32>} : memref<8x256xf32, #tpu.memory_space<vmem>>, vector<8x256xf32>,
    return
  }
  func.func @transform_0(%arg0: i32) -> (i32, i32) {
    %c0_i32 = arith.constant 0 : i32
    %c0_i32_0 = arith.constant 0 : i32
    return %arg0, %c0_i32 : i32, i32
  }
  func.func @transform_1(%arg0: i32) -> (i32, i32) {
    %c0_i32 = arith.constant 0 : i32
    %c0_i32_0 = arith.constant 0 : i32
    return %arg0, %c0_i32 : i32, i32
  }
}

</mosaic_0001>

<llo_original>
// kernel: tpu_custom_call.1
$region0: #{tpu_custom_call.1}
  #allocation0 [shape = 'u32[]', space=smem, size = 0x4, offset = 0x4, fixed_abs, tag = 'smem constant byte address 0x4 - core index']
  #allocation1 [shape = 'u32[144,128]{1,0:T(1,128)}', space=vmem, size = 0x12000, scoped, tag = 'internal scratch']
  %s0 = inlined_call_operand.hbm [shape: f32[8,256], index: 0, kind: input, shape index: {}]
  %s1 = inlined_call_operand.hbm [shape: f32[8,256], index: 1, kind: output, shape index: {}]
  %s2 = sld [smem:[#allocation0]]
  $region18: #{tpu_custom_call.1} parent=0
    _
  %s4 = ssub.s32 1, %s2
  %s5 = scalar_select 0, %s4, %s2
  $region1: #{tpu_custom_call.1} parent=0
    #allocation2 [shape = 'u8[8192]{0}', space=vmem, size = 0x2000, scoped, tag = 'input window, operand 0, single buffered']
    #allocation3 [shape = 's32[1]{0}', space=sflag, size = 0x4, scoped, tag = 'scoped memory for tpu_custom_call.1']
    #allocation4 [shape = 's32[1]{0}', space=sflag, size = 0x4, scoped, tag = 'scoped memory for tpu_custom_call.1']
    #allocation5 [shape = 'u8[8192]{0}', space=vmem, size = 0x2000, scoped, tag = 'output window, operand 0, single buffered']
    %6 = vsyncpa [#allocation3], 0
    %7 = vsyncpa [#allocation4], 0
    // Predicated region
    $region2: #{tpu_custom_call.1} parent=1 // pred_check
      _
    $region3: #{tpu_custom_call.1} parent=1 // pred_check_branch
      %9 = sbr.rel (0) target = $region5
    $region4: #{tpu_custom_call.1} parent=1 // pred_region
      %s11 = ssub.s32 256, 256
      %12 = vsyncadd [#allocation3], %s11
      %s14 = sshll.u32 [#allocation2], 4
      %s15 = int_to_ptr.vmem [resolvable:$true] %s14
      %17 = dma.hbm_to_vmem [thread:$0]  %s0, 256, %s15, [#allocation3]
    $region5: #{tpu_custom_call.1} parent=1 // pred_fallthru
      _
    // Predicated region
    $region6: #{tpu_custom_call.1} parent=1 // pred_check
      _
    $region7: #{tpu_custom_call.1} parent=1 // pred_check_branch
      %19 = sbr.rel (0) target = $region9
    $region8: #{tpu_custom_call.1} parent=1 // pred_region
      %20 = dma.done [#allocation3], 256
    $region9: #{tpu_custom_call.1} parent=1 // pred_fallthru
      _
    %v21 = vld [vmem:[#allocation2] sm:$0xff]
    %v22 = vld [vmem:[#allocation2 + $0x8] sm:$0xff]
    %v23 = vadd.f32 %v21, %v22
    %24 = vadd.xlane.f32.xlu0 %v23
    %v25 = vpop.xlane.xlu0 %24
    %v26 = vmul.f32 %v25, 0.00390625
    %v27 = vsub.f32 %v21, %v26
    %v28 = vsub.f32 %v22, %v26
    %v29 = vmul.f32 %v27, %v27
    %v30 = vmul.f32 %v28, %v28
    %v31 = vadd.f32 %v29, %v30
    %32 = vadd.xlane.f32.xlu0 %v31
    %v33 = vpop.xlane.xlu0 %32
    %v34 = vmul.f32 %v33, 0.00390625
    %v35 = vadd.f32 %v34, 1e-08
    %v36 = vrsqrt.pop %v35
    %v37 = vmul.f32 %v27, %v36
    %v38 = vmul.f32 %v28, %v36
    %39 = vst [vmem:[#allocation5] sm:$0xff] %v37
    %40 = vst [vmem:[#allocation5 + $0x8] sm:$0xff] %v38
    // Predicated region
    $region10: #{tpu_custom_call.1} parent=1 // pred_check
      _
    $region11: #{tpu_custom_call.1} parent=1 // pred_check_branch
      %42 = sbr.rel (0) target = $region13
    $region12: #{tpu_custom_call.1} parent=1 // pred_region
      %s44 = ssub.s32 256, 256
      %45 = vsyncadd [#allocation4], %s44
      %s47 = sshll.u32 [#allocation5], 4
      %s48 = int_to_ptr.vmem [resolvable:$true] %s47
      %50 = dma.vmem_to_hbm [thread:$0]  %s48, 256, %s1, [#allocation4]
    $region13: #{tpu_custom_call.1} parent=1 // pred_fallthru
      _
    // Predicated region
    $region14: #{tpu_custom_call.1} parent=1 // pred_check
      _
    $region15: #{tpu_custom_call.1} parent=1 // pred_check_branch
      %52 = sbr.rel (0) target = $region17
    $region16: #{tpu_custom_call.1} parent=1 // pred_region
      %53 = dma.done [#allocation4], 256
    $region17: #{tpu_custom_call.1} parent=1 // pred_fallthru
      _
    %54 = vsyncpa [#allocation3], 1
    %55 = vsyncpa [#allocation4], 1

</llo_original>
